<compile_context>
chip_gen: v7x
topology: tpu7x:2x2x1
jax: 0.10.0
libtpu: 0.0.40
codegen_flags: <defaults>
</compile_context>

<pallas_src>
import jax
import jax.numpy as jnp
from jax.experimental import pallas as pl
from jax.experimental.pallas import tpu as pltpu


def _id_kernel(tgt_ref, s_ref, t_ref, o_ref):
    """One grid step == `bn` batch instances (rows are fully independent)."""
    bn, CL = s_ref.shape
    C = tgt_ref.shape[1]
    L = CL // C

    s = s_ref[...].astype(jnp.float32)          # native-dtype DMA, f32 in vregs
    t = t_ref[...].astype(jnp.float32)
    diff = s - t
    adiff = jnp.abs(diff)
    huber = jnp.where(adiff < 1.0, 0.5 * diff * diff, adiff - 0.5)

    # Expand the (bn, C) channel targets to a (bn, CL) lane mask with a single
    # MXU matmul against a constant 0/1 block-diagonal matrix.  Exact at any
    # MXU precision (operands are exactly {0,1}) and free (MXU is idle here).
    r = jax.lax.broadcasted_iota(jnp.int32, (C, CL), 0)     # channel id per row
    j = jax.lax.broadcasted_iota(jnp.int32, (C, CL), 1)     # flat lane id
    expand = jnp.logical_and(j >= r * L, j < (r + 1) * L).astype(jnp.float32)
    mask = jnp.dot(tgt_ref[...].astype(jnp.float32), expand,
                   preferred_element_type=jnp.float32)      # (bn, CL), values {0,1}

    # Per-instance masked Huber sum -> this block's own output slot.
    o_ref[...] = jnp.sum(huber * mask, axis=1, keepdims=True)   # (bn, 1)


def _pick_block_rows(N, CL, itemsize_s, itemsize_t):
    """Rows per grid step: pipeline/megacore-aware, VMEM-safe, sublane-aligned."""
    align = max(8, 32 // max(1, min(itemsize_s, itemsize_t)))   # f32:8, bf16:16, int8:32
    bytes_per_row = CL * (itemsize_s + itemsize_t)
    bn = (4 << 20) // max(bytes_per_row, 1)      # ~4 MiB streamed per step (x2 buffers)
    bn = min(bn, 1024)                           # diminishing returns past ~1k rows
    bn = min(bn, max(align, pl.cdiv(N, 8)))      # >= ~8 steps: pipeline depth + 2nd TC (v7x)
    bn = max(bn, 1)
    if bn < N:
        bn = ((bn + align - 1) // align) * align  # round up to the sublane pack
    return N if bn >= N else bn


def id_loss(le_student, le_teacher, targets):
    """Pallas-backed ID.forward.  Returns a scalar float32 loss."""
    N, C, L = le_student.shape
    CL = C * L

    # Metadata-only reshape: lane axis is C*L wide (fully dense when C*L % 128 == 0).
    s_flat = le_student.reshape(N, CL)
    t_flat = le_teacher.reshape(N, CL)

    bn = _pick_block_rows(N, CL, s_flat.dtype.itemsize, t_flat.dtype.itemsize)
    n_blocks = pl.cdiv(N, bn)

    cost = pl.CostEstimate(
        flops=N * CL * 8 + 2 * N * C * CL,       # elementwise Huber + mask-expansion matmul
        transcendentals=0,
        bytes_accessed=N * CL * (s_flat.dtype.itemsize + t_flat.dtype.itemsize)
        + N * C * targets.dtype.itemsize + N * 4,
    )

    per_inst = pl.pallas_call(
        _id_kernel,
        out_shape=jax.ShapeDtypeStruct((N, 1), jnp.float32),
        grid_spec=pltpu.PrefetchScalarGridSpec(
            num_scalar_prefetch=0,
            grid=(n_blocks,),
            in_specs=[
                pl.BlockSpec((bn, C), lambda i: (i, 0)),    # targets (tiny, per-block)
                pl.BlockSpec((bn, CL), lambda i: (i, 0)),   # student (native dtype)
                pl.BlockSpec((bn, CL), lambda i: (i, 0)),   # teacher (native dtype)
            ],
            out_specs=pl.BlockSpec((bn, 1), lambda i: (i, 0)),
        ),
        compiler_params=pltpu.CompilerParams(
            dimension_semantics=("parallel",),   # independent per-block outputs
        ),
        cost_estimate=cost,
    )(targets, s_flat, t_flat)

    # Tiny (N,)-sized epilogue: gate n_pos > 1 and mean-normalize by k * L.
    k = jnp.sum(targets.astype(jnp.float32), axis=1)        # positives per instance
    scale = jnp.where(k > 1.0, 1.0 / jnp.maximum(k * L, 1.0), 0.0)
    return jnp.sum(per_inst[:, 0] * scale)


def _ref_loss(le_student, le_teacher, targets):
    """Pure-JAX reference (same semantics) for validation."""
    N, C, L = le_student.shape
    mask = targets[:, :, None].astype(jnp.float32)
    diff = le_student.astype(jnp.float32) - le_teacher.astype(jnp.float32)
    adiff = jnp.abs(diff)
    huber = jnp.where(adiff < 1.0, 0.5 * diff * diff, adiff - 0.5)
    per_inst = jnp.sum(huber * mask, axis=(1, 2))
    k = jnp.sum(targets.astype(jnp.float32), axis=1)
    return jnp.sum(jnp.where(k > 1.0, per_inst / jnp.maximum(k * L, 1.0), 0.0))


if __name__ == "__main__":
    key = jax.random.PRNGKey(0)
    k1, k2, k3 = jax.random.split(key, 3)

    # Case 1: f32 inputs, evenly divisible grid (N=32 -> 4 blocks of 8 rows).
    N, C, L = 32, 8, 16      # C * L = 128 -> fully lane-dense blocks
    le_student = jax.random.normal(k1, (N, C, L), dtype=jnp.float32)
    le_teacher = jax.random.normal(k2, (N, C, L), dtype=jnp.float32)
    targets = (jax.random.uniform(k3, (N, C)) > 0.5).astype(jnp.float32)
    targets = targets.at[0].set(
        jnp.zeros((C,), jnp.float32).at[0].set(1.0))        # single positive -> gated out
    targets = targets.at[1].set(jnp.ones((C,), jnp.float32))  # all positive

    loss = jax.block_until_ready(id_loss(le_student, le_teacher, targets))
    ref = jax.block_until_ready(_ref_loss(le_student, le_teacher, targets))
    assert jnp.allclose(loss, ref, atol=1e-5, rtol=1e-5), (loss, ref)

    # Case 2: bf16 inputs, ragged grid (N=37, 16-row blocks -> pad-free cdiv
    # edge block; exercises native-dtype loads and partial-block writeback).
    k4, k5, k6 = jax.random.split(jax.random.PRNGKey(1), 3)
    N2 = 37
    s2 = jax.random.normal(k4, (N2, C, L), dtype=jnp.bfloat16)
    t2 = jax.random.normal(k5, (N2, C, L), dtype=jnp.bfloat16)
    tg2 = (jax.random.uniform(k6, (N2, C)) > 0.5).astype(jnp.float32)

    loss2 = jax.block_until_ready(id_loss(s2, t2, tg2))
    ref2 = jax.block_until_ready(_ref_loss(s2, t2, tg2))
    assert jnp.allclose(loss2, ref2, atol=1e-5, rtol=1e-5), (loss2, ref2)

    print("KERNEL_OK")
</pallas_src>

<mosaic_0001>
module attributes {stable_mosaic.version = 11 : i64} {
  func.func @_id_kernel(%arg0: i32, %arg1: memref<8x8xf32, #tpu.memory_space<vmem>>, %arg2: memref<8x128xf32, #tpu.memory_space<vmem>>, %arg3: memref<8x128xf32, #tpu.memory_space<vmem>>, %arg4: memref<8x1xf32, #tpu.memory_space<vmem>>) attributes {dimension_semantics = [#tpu.dimension_semantics<parallel>], iteration_bounds = array<i64: 4>, scalar_prefetch = 0 : i64, scratch_operands = 0 : i64, tpu.core_type = #tpu.core_type<tc>, window_params = [{transform_indices = @transform_0, window_bounds = array<i64: 8, 8>}, {transform_indices = @transform_1, window_bounds = array<i64: 8, 128>}, {transform_indices = @transform_2, window_bounds = array<i64: 8, 128>}, {transform_indices = @transform_3, window_bounds = array<i64: 8, 1>}]} {
    %c0 = arith.constant 0 : index
    %c0_0 = arith.constant 0 : index
    %0 = vector.load %arg2[%c0, %c0_0] : memref<8x128xf32, #tpu.memory_space<vmem>>, vector<8x128xf32>
    %c0_1 = arith.constant 0 : index
    %c0_2 = arith.constant 0 : index
    %1 = vector.load %arg3[%c0_1, %c0_2] : memref<8x128xf32, #tpu.memory_space<vmem>>, vector<8x128xf32>
    %2 = arith.subf %0, %1 : vector<8x128xf32>
    %3 = math.absf %2 : vector<8x128xf32>
    %cst = arith.constant 1.000000e+00 : f32
    %4 = vector.broadcast %cst : f32 to vector<8x128xf32>
    %5 = arith.cmpf olt, %3, %4 : vector<8x128xf32>
    %cst_3 = arith.constant 5.000000e-01 : f32
    %6 = vector.broadcast %cst_3 : f32 to vector<8x128xf32>
    %7 = arith.mulf %6, %2 : vector<8x128xf32>
    %8 = arith.mulf %7, %2 : vector<8x128xf32>
    %cst_4 = arith.constant 5.000000e-01 : f32
    %9 = vector.broadcast %cst_4 : f32 to vector<8x128xf32>
    %10 = arith.subf %3, %9 : vector<8x128xf32>
    %11 = arith.select %5, %8, %10 : vector<8x128xi1>, vector<8x128xf32>
    %12 = tpu.iota {dimensions = array<i32: 0>} : vector<8x128xi32>
    %13 = tpu.iota {dimensions = array<i32: 1>} : vector<8x128xi32>
    %c16_i32 = arith.constant 16 : i32
    %14 = vector.broadcast %c16_i32 : i32 to vector<8x128xi32>
    %15 = arith.muli %12, %14 : vector<8x128xi32>
    %16 = arith.cmpi sge, %13, %15 : vector<8x128xi32>
    %c1_i32 = arith.constant 1 : i32
    %17 = vector.broadcast %c1_i32 : i32 to vector<8x128xi32>
    %18 = arith.addi %12, %17 : vector<8x128xi32>
    %c16_i32_5 = arith.constant 16 : i32
    %19 = vector.broadcast %c16_i32_5 : i32 to vector<8x128xi32>
    %20 = arith.muli %18, %19 : vector<8x128xi32>
    %21 = arith.cmpi slt, %13, %20 : vector<8x128xi32>
    %22 = arith.andi %16, %21 : vector<8x128xi1>
    %23 = arith.extui %22 : vector<8x128xi1> to vector<8x128xi32>
    %24 = arith.sitofp %23 : vector<8x128xi32> to vector<8x128xf32>
    %c0_6 = arith.constant 0 : index
    %c0_7 = arith.constant 0 : index
    %25 = vector.load %arg1[%c0_6, %c0_7] : memref<8x8xf32, #tpu.memory_space<vmem>>, vector<8x8xf32>
    %cst_8 = arith.constant dense<0.000000e+00> : vector<8x128xf32>
    %26 = tpu.matmul %25, %24, %cst_8 {dimension_numbers = #tpu.dot_dimension_numbers<[1], [0], [0], [1], [0, 0, 1, 1], [], []>} : vector<8x8xf32>, vector<8x128xf32>, vector<8x128xf32> -> vector<8x128xf32>
    %27 = arith.mulf %11, %26 : vector<8x128xf32>
    %cst_9 = arith.constant dense<0.000000e+00> : vector<8xf32>
    %28 = vector.multi_reduction <add>, %27, %cst_9 [1] : vector<8x128xf32> to vector<8xf32>
    %29 = vector.shape_cast %28 : vector<8xf32> to vector<8x1xf32>
    %c0_10 = arith.constant 0 : index
    %c0_11 = arith.constant 0 : index
    %30 = vector.load %arg4[%c0_10, %c0_11] : memref<8x1xf32, #tpu.memory_space<vmem>>, vector<8x1xf32>
    tpu.vector_store %arg4[%c0_10, %c0_11], %29 {strides = array<i32>} : memref<8x1xf32, #tpu.memory_space<vmem>>, vector<8x1xf32>,
    return
  }
  func.func @transform_0(%arg0: i32) -> (i32, i32) {
    %c0_i32 = arith.constant 0 : i32
    %c0_i32_0 = arith.constant 0 : i32
    return %arg0, %c0_i32 : i32, i32
  }
  func.func @transform_1(%arg0: i32) -> (i32, i32) {
    %c0_i32 = arith.constant 0 : i32
    %c0_i32_0 = arith.constant 0 : i32
    return %arg0, %c0_i32 : i32, i32
  }
  func.func @transform_2(%arg0: i32) -> (i32, i32) {
    %c0_i32 = arith.constant 0 : i32
    %c0_i32_0 = arith.constant 0 : i32
    return %arg0, %c0_i32 : i32, i32
  }
  func.func @transform_3(%arg0: i32) -> (i32, i32) {
    %c0_i32 = arith.constant 0 : i32
    %c0_i32_0 = arith.constant 0 : i32
    return %arg0, %c0_i32 : i32, i32
  }
}

</mosaic_0001>

<llo_original>
// kernel: tpu_custom_call.1
$region0: #{tpu_custom_call.1}
  #allocation0 [shape = 'u32[]', space=smem, size = 0x4, offset = 0x4, fixed_abs, tag = 'smem constant byte address 0x4 - core index']
  #allocation1 [shape = 'u32[144,128]{1,0:T(1,128)}', space=vmem, size = 0x12000, scoped, tag = 'internal scratch']
  %s0 = inlined_call_operand.vmem [shape: f32[32,8], index: 0, kind: input, shape index: {}]
  %s1 = inlined_call_operand.vmem [shape: f32[32,128], index: 1, kind: input, shape index: {}]
  %s2 = inlined_call_operand.hbm [shape: f32[32,128], index: 2, kind: input, shape index: {}]
  %s3 = inlined_call_operand.vmem [shape: f32[32,1], index: 3, kind: output, shape index: {}]
  %s4 = sld [smem:[#allocation0]]
  $region49: #{tpu_custom_call.1} parent=0
    _
  %s6 = ssub.s32 1, %s4
  %s7 = scalar_select 0, %s6, %s4
  $region1: #{tpu_custom_call.1} parent=0
    #allocation2 [shape = 'u8[8192]{0}', space=vmem, size = 0x2000, scoped, tag = 'input window, operand 2']
    #allocation3 [shape = 's32[2]{0}', space=sflag, size = 0x8, scoped, tag = 'scoped memory for tpu_custom_call.1']
    %8 = vsyncpa [#allocation3], 0
    %s9 = scalar_lea.sflag [#allocation3], 1
    %10 = vsyncpa %s9, 0
    loop: start=0, step=1, limit=6
    $region2: #{tpu_custom_call.1} parent=1 // loop_pre_header
      _
    $region3: #{tpu_custom_call.1} parent=1 // loop_header
      %s12 = sphi 0, %s16
      %p13 = scmp.ge.s32.totalorder %s12, 6
      %s22 = sphi 0, %s24
      %s25 = sphi 0, %s22
      %s26 = sphi 0, %s25
      %s42 = sphi 0, %s26
      %s48 = sphi 0, %s50
      %s51 = sphi 0, %s48
      %s52 = sphi 0, %s51
      %s68 = sphi 0, %s52
      %s74 = sphi 0, %s76
      %s77 = sphi 0, %s74
      %s78 = sphi 0, %s77
      %s94 = sphi 0, %s78
      %s100 = sphi 0, %s102
      %s103 = sphi 0, %s100
      %s104 = sphi 0, %s103
      %s120 = sphi 0, %s104
    $region4: #{tpu_custom_call.1} parent=1 // loop_header_branch
      %15 = sbr.rel (%p13) target = $region8
    $region5: #{tpu_custom_call.1} parent=1 // loop_body
      %s17 = ssub.s32 %s12, 1
      %s18 = ssub.s32 %s12, 2
      %s19 = sadd.s32 %s12, 1
      %s20 = ssub.s32 %s12, %s19
      %p21 = scmp.eq.s32.totalorder %s20, 0
      %s23 = sadd.s32 %s22, 1
      %s24 = scalar_select %p21, %s22, %s23
      %p27 = pneg %p21
      %p28 = scmp.eq.s32.totalorder %s12, 3
      %p29 = por %p27, %p28
      %p30 = scmp.ne.s32.totalorder %s22, %s25
      %p31 = scmp.eq.s32.totalorder %s12, 0
      %p32 = por %p30, %p31
      %p33 = scmp.ne.s32.totalorder %s22, %s25
      %p34 = scmp.eq.s32.totalorder %s17, 3
      %p35 = por %p33, %p34
      %p36 = scmp.ne.s32.totalorder %s25, %s26
      %p37 = scmp.eq.s32.totalorder %s17, 0
      %p38 = por %p36, %p37
      %p39 = scmp.ne.s32.totalorder %s25, %s26
      %p40 = scmp.eq.s32.totalorder %s18, 3
      %p41 = por %p39, %p40
      %p43 = scmp.ne.s32.totalorder %s26, %s42
      %p44 = scmp.eq.s32.totalorder %s18, 0
      %p45 = por %p43, %p44
      %s46 = ssub.s32 %s12, %s19
      %p47 = scmp.eq.s32.totalorder %s46, 0
      %s49 = sadd.s32 %s48, 1
      %s50 = scalar_select %p47, %s48, %s49
      %p53 = pneg %p47
      %p54 = scmp.eq.s32.totalorder %s12, 3
      %p55 = por %p53, %p54
      %p56 = scmp.ne.s32.totalorder %s48, %s51
      %p57 = scmp.eq.s32.totalorder %s12, 0
      %p58 = por %p56, %p57
      %p59 = scmp.ne.s32.totalorder %s48, %s51
      %p60 = scmp.eq.s32.totalorder %s17, 3
      %p61 = por %p59, %p60
      %p62 = scmp.ne.s32.totalorder %s51, %s52
      %p63 = scmp.eq.s32.totalorder %s17, 0
      %p64 = por %p62, %p63
      %p65 = scmp.ne.s32.totalorder %s51, %s52
      %p66 = scmp.eq.s32.totalorder %s18, 3
      %p67 = por %p65, %p66
      %p69 = scmp.ne.s32.totalorder %s52, %s68
      %p70 = scmp.eq.s32.totalorder %s18, 0
      %p71 = por %p69, %p70
      %s72 = ssub.s32 %s12, %s19
      %p73 = scmp.eq.s32.totalorder %s72, 0
      %s75 = sadd.s32 %s74, 1
      %s76 = scalar_select %p73, %s74, %s75
      %p79 = pneg %p73
      %p80 = scmp.eq.s32.totalorder %s12, 3
      %p81 = por %p79, %p80
      %p82 = scmp.ne.s32.totalorder %s74, %s77
      %p83 = scmp.eq.s32.totalorder %s12, 0
      %p84 = por %p82, %p83
      %p85 = scmp.ne.s32.totalorder %s74, %s77
      %p86 = scmp.eq.s32.totalorder %s17, 3
      %p87 = por %p85, %p86
      %p88 = scmp.ne.s32.totalorder %s77, %s78
      %p89 = scmp.eq.s32.totalorder %s17, 0
      %p90 = por %p88, %p89
      %p91 = scmp.ne.s32.totalorder %s77, %s78
      %p92 = scmp.eq.s32.totalorder %s18, 3
      %p93 = por %p91, %p92
      %p95 = scmp.ne.s32.totalorder %s78, %s94
      %p96 = scmp.eq.s32.totalorder %s18, 0
      %p97 = por %p95, %p96
      %s98 = ssub.s32 %s12, %s19
      %p99 = scmp.eq.s32.totalorder %s98, 0
      %s101 = sadd.s32 %s100, 1
      %s102 = scalar_select %p99, %s100, %s101
      %p105 = pneg %p99
      %p106 = scmp.eq.s32.totalorder %s12, 3
      %p107 = por %p105, %p106
      %p108 = scmp.ne.s32.totalorder %s100, %s103
      %p109 = scmp.eq.s32.totalorder %s12, 0
      %p110 = por %p108, %p109
      %p111 = scmp.ne.s32.totalorder %s100, %s103
      %p112 = scmp.eq.s32.totalorder %s17, 3
      %p113 = por %p111, %p112
      %p114 = scmp.ne.s32.totalorder %s103, %s104
      %p115 = scmp.eq.s32.totalorder %s17, 0
      %p116 = por %p114, %p115
      %p117 = scmp.ne.s32.totalorder %s103, %s104
      %p118 = scmp.eq.s32.totalorder %s18, 3
      %p119 = por %p117, %p118
      %p121 = scmp.ne.s32.totalorder %s104, %s120
      %p122 = scmp.eq.s32.totalorder %s18, 0
      %p123 = por %p121, %p122
      %p124 = scmp.le.s32.totalorder 1, %s12
      %p125 = scmp.lt.s32.totalorder %s12, 5
      %p126 = pnand %p124, %p125
      %p127 = pneg %p126
      // Predicated region
      $region9: #{tpu_custom_call.1} parent=5 // pred_check
        _
      $region10: #{tpu_custom_call.1} parent=5 // pred_check_branch
        %129 = sbr.rel (%p126) target = $region12
      $region11: #{tpu_custom_call.1} parent=5 // pred_region
        %s130 = ssub.s32 %s12, 1
      $region12: #{tpu_custom_call.1} parent=5 // pred_fallthru
        _
      %p131 = scmp.lt.s32.totalorder %s12, 4
      // Predicated region
      $region13: #{tpu_custom_call.1} parent=5 // pred_check
        %p132 = pneg %p131
      $region14: #{tpu_custom_call.1} parent=5 // pred_check_branch
        %134 = sbr.rel (%p132) target = $region16
      $region15: #{tpu_custom_call.1} parent=5 // pred_region
        // Predicated region
        $region17: #{tpu_custom_call.1} parent=15 // pred_check
          %p135 = pneg %p32
        $region18: #{tpu_custom_call.1} parent=15 // pred_check_branch
          %137 = sbr.rel (%p135) target = $region20
        $region19: #{tpu_custom_call.1} parent=15 // pred_region
          %p138 = scmp.lt.s32.totalorder %s12, 3
          %s139 = scalar_select %p138, %s12, 3
          %s140 = smul.addr %s139, 8
          %s141 = scalar_lea.vmem %s0, %s140
        $region20: #{tpu_custom_call.1} parent=15 // pred_fallthru
          _
        // Predicated region
        $region21: #{tpu_custom_call.1} parent=15 // pred_check
          %p142 = pneg %p58
        $region22: #{tpu_custom_call.1} parent=15 // pred_check_branch
          %144 = sbr.rel (%p142) target = $region24
        $region23: #{tpu_custom_call.1} parent=15 // pred_region
          %p145 = scmp.lt.s32.totalorder %s12, 3
          %s146 = scalar_select %p145, %s12, 3
          %s147 = smul.addr %s146, 8
          %s148 = scalar_lea.vmem %s1, %s147
        $region24: #{tpu_custom_call.1} parent=15 // pred_fallthru
          _
        // Predicated region
        $region25: #{tpu_custom_call.1} parent=15 // pred_check
          %p149 = pneg %p84
        $region26: #{tpu_custom_call.1} parent=15 // pred_check_branch
          %151 = sbr.rel (%p149) target = $region28
        $region27: #{tpu_custom_call.1} parent=15 // pred_region
          %s152 = sand.u32 %s74, 1
          %s153 = scalar_lea.sflag [#allocation3], %s152
          %s154 = sand.u32 %s74, 1
          %s155 = smul.addr %s154, 8
          %s156 = scalar_lea.vmem [#allocation2], %s155
          %s158 = ssub.s32 128, 128
          %159 = vsyncadd %s153, %s158
          %s160 = smul.addr %s12, 128
          %s161 = scalar_lea.hbm %s2, %s160
          %s163 = sshll.u32 %s156, 4
          %s164 = int_to_ptr.vmem [resolvable:$true] %s163
          %166 = dma.hbm_to_vmem [thread:$0]  %s161, 128, %s164, %s153
        $region28: #{tpu_custom_call.1} parent=15 // pred_fallthru
          _
      $region16: #{tpu_custom_call.1} parent=5 // pred_fallthru
        _
      %p167 = scmp.le.s32.totalorder 1, %s12
      %p168 = scmp.lt.s32.totalorder %s12, 5
      %p169 = pnand %p167, %p168
      %p170 = pneg %p169
      // Predicated region
      $region29: #{tpu_custom_call.1} parent=5 // pred_check
        _
      $region30: #{tpu_custom_call.1} parent=5 // pred_check_branch
        %172 = sbr.rel (%p169) target = $region32
      $region31: #{tpu_custom_call.1} parent=5 // pred_region
        %s173 = ssub.s32 %s12, 1
        %s174 = sand.u32 %s77, 1
        %s175 = scalar_lea.sflag [#allocation3], %s174
        %s176 = sand.u32 %s77, 1
        %s177 = smul.addr %s176, 8
        %s178 = scalar_lea.vmem [#allocation2], %s177
        // Predicated region
        $region33: #{tpu_custom_call.1} parent=31 // pred_check
          %p179 = pneg %p90
        $region34: #{tpu_custom_call.1} parent=31 // pred_check_branch
          %181 = sbr.rel (%p179) target = $region36
        $region35: #{tpu_custom_call.1} parent=31 // pred_region
          %182 = dma.done %s175, 128
        $region36: #{tpu_custom_call.1} parent=31 // pred_fallthru
          _
        %p183 = scmp.lt.s32.totalorder %s17, 3
        %s184 = scalar_select %p183, %s17, 3
        %s185 = smul.addr %s184, 8
        %s186 = scalar_lea.vmem %s0, %s185
        %p187 = pneg %p38
        %p188 = pneg %p35
        %p189 = scmp.lt.s32.totalorder %s17, 3
        %s190 = scalar_select %p189, %s17, 3
        %s191 = smul.addr %s190, 8
        %s192 = scalar_lea.vmem %s1, %s191
        %p193 = pneg %p64
        %p194 = pneg %p61
        %s195 = sand.u32 %s77, 1
        %s196 = scalar_lea.sflag [#allocation3], %s195
        %s197 = sand.u32 %s77, 1
        %s198 = smul.addr %s197, 8
        %s199 = scalar_lea.vmem [#allocation2], %s198
        %p200 = pneg %p90
        %p201 = pneg %p87
        %p202 = pneg %p116
        %p203 = pneg %p113
        %p204 = scmp.lt.s32.totalorder %s17, 3
        %s205 = scalar_select %p204, %s17, 3
        %s206 = smul.addr %s205, 8
        %s207 = scalar_lea.vmem %s3, %s206
        %p208 = scmp.lt.s32.totalorder %s17, 3
        %s209 = scalar_select %p208, %s17, 3
        %s210 = smul.addr %s209, 8
        %s211 = scalar_lea.vmem %s0, %s210
        %p212 = scmp.lt.s32.totalorder %s17, 3
        %s213 = scalar_select %p212, %s17, 3
        %s214 = smul.addr %s213, 8
        %s215 = scalar_lea.vmem %s1, %s214
        %p216 = scmp.lt.s32.totalorder %s17, 3
        %s217 = scalar_select %p216, %s17, 3
        %s218 = smul.addr %s217, 8
        %s219 = scalar_lea.vmem %s3, %s218
        %v220 = vld [vmem:[%s215] sm:$0xff]
        %v221 = vld [vmem:[%s178] sm:$0xff]
        %v222 = vsub.f32 %v220, %v221
        %v223 = vand.u32 2147483647, %v222
        %vm224 = vcmp.lt.f32.partialorder %v223, 1.0
        %v225 = vmul.f32 %v222, 0.5
        %v226 = vmul.f32 %v225, %v222
        %v227 = vsub.f32 %v223, 0.5
        %v228 = vsel %vm224, %v226, %v227
        %v229 = vlaneseq
        %v230 = vshrl.u32 %v229, 7
        %v231 = vlaneseq
        %v232 = vand.u32 %v231, 127
        %v233 = vmul.u32 %v230, 16
        %vm234 = vcmp.ge.s32.totalorder %v232, %v233
        %v235 = vadd.s32 %v230, 1
        %v236 = vmul.u32 %v235, 16
        %vm237 = vcmp.lt.s32.totalorder %v232, %v236
        %vm238 = vmand %vm234, %vm237
        %v239 = vsel %vm238, 1, 0
        %v240 = vcvt.s32.f32 %v239
        %v241 = vld [vmem:[%s211] sm:$0xff]
        %vm242 = vcmask 64512
        %v244 = vsel %vm242, %v241, 0
        %246 = vmatprep.subr.mxu0 0.0
        %247 = vmatpush1.msra.mxu0 %v240
        %248 = vmatprep.subr.mxu0 0.0
        %249 = vmatpush1.msra.mxu0 0.0
        %250 = vmatprep.subr.mxu0 0.0
        %251 = vmatpush1.msra.mxu0 0.0
        %252 = vmatprep.subr.mxu0 0.0
        %253 = vmatpush1.msra.mxu0 0.0
        %254 = vmatprep.subr.mxu0 0.0
        %255 = vmatpush1.msra.mxu0 0.0
        %256 = vmatprep.subr.mxu0 0.0
        %257 = vmatpush1.msra.mxu0 0.0
        %258 = vmatprep.subr.mxu0 0.0
        %259 = vmatpush1.msra.mxu0 0.0
        %260 = vmatprep.subr.mxu0 0.0
        %261 = vmatpush1.msra.mxu0 0.0
        %262 = vmatprep.subr.mxu0 0.0
        %263 = vmatpush1.msra.mxu0 0.0
        %264 = vmatprep.subr.mxu0 0.0
        %265 = vmatpush1.msra.mxu0 0.0
        %266 = vmatprep.subr.mxu0 0.0
        %267 = vmatpush1.msra.mxu0 0.0
        %268 = vmatprep.subr.mxu0 0.0
        %269 = vmatpush1.msra.mxu0 0.0
        %270 = vmatprep.subr.mxu0 0.0
        %271 = vmatpush1.msra.mxu0 0.0
        %272 = vmatprep.subr.mxu0 0.0
        %273 = vmatpush1.msra.mxu0 0.0
        %274 = vmatprep.subr.mxu0 0.0
        %275 = vmatpush1.msra.mxu0 0.0
        %276 = vmatprep.subr.mxu0 0.0
        %277 = vmatpush1.msra.mxu0 0.0
        %278 = vmatprep.subr.mxu0 0.0
        %279 = vmatpush1.msra.mxu0 0.0
        %280 = vmatprep.subr.mxu0 0.0
        %281 = vmatpush1.msra.mxu0 0.0
        %282 = vmatprep.subr.mxu0 0.0
        %283 = vmatpush1.msra.mxu0 0.0
        %284 = vmatprep.subr.mxu0 0.0
        %285 = vmatpush1.msra.mxu0 0.0
        %286 = vmatprep.subr.mxu0 0.0
        %287 = vmatpush1.msra.mxu0 0.0
        %288 = vmatprep.subr.mxu0 0.0
        %289 = vmatpush1.msra.mxu0 0.0
        %290 = vmatprep.subr.mxu0 0.0
        %291 = vmatpush1.msra.mxu0 0.0
        %292 = vmatprep.subr.mxu0 0.0
        %293 = vmatpush1.msra.mxu0 0.0
        %294 = vmatprep.subr.mxu0 0.0
        %295 = vmatpush1.msra.mxu0 0.0
        %296 = vmatprep.subr.mxu0 0.0
        %297 = vmatpush1.msra.mxu0 0.0
        %298 = vmatprep.subr.mxu0 0.0
        %299 = vmatpush1.msra.mxu0 0.0
        %300 = vmatprep.subr.mxu0 0.0
        %301 = vmatpush1.msra.mxu0 0.0
        %302 = vmatprep.subr.mxu0 0.0
        %303 = vmatpush1.msra.mxu0 0.0
        %304 = vmatprep.subr.mxu0 0.0
        %305 = vmatpush1.msra.mxu0 0.0
        %306 = vmatprep.subr.mxu0 0.0
        %307 = vmatpush1.msra.mxu0 0.0
        %308 = vmatprep.subr.mxu0 0.0
        %309 = vmatpush1.msra.mxu0 0.0
        %310 = vmatprep.mubr.f32.mxu0 0.0
        %311 = vmatmul.mubr.f32.gmra.mrb[0].mxu0 %v244
        %v312 = vpop.f32.mrb[0].mxu0
        %v313 = vadd.f32 0.0, %v312
        %v314 = vpop.f32.mrb[0].mxu0
        %315 = vdwg.mxu0
        %v316 = vmul.f32 %v228, %v313
        %317 = vadd.xlane.f32.xlu0 %v316
        %v318 = vpop.xlane.xlu0 %317
        %vm319 = vcmask 7168
        %320 = vst.msk [vmem:[%s219] sm:$0xff] %vm319, %v318
        %p321 = scmp.lt.s32.totalorder %s17, 3
        %s322 = scalar_select %p321, %s17, 3
        %s323 = smul.addr %s322, 8
        %s324 = scalar_lea.vmem %s3, %s323
        // Predicated region
        $region37: #{tpu_custom_call.1} parent=31 // pred_check
          %p325 = pneg %p113
        $region38: #{tpu_custom_call.1} parent=31 // pred_check_branch
          %327 = sbr.rel (%p325) target = $region40
        $region39: #{tpu_custom_call.1} parent=31 // pred_region
          _
        $region40: #{tpu_custom_call.1} parent=31 // pred_fallthru
          _
      $region32: #{tpu_custom_call.1} parent=5 // pred_fallthru
        _
      %p328 = scmp.le.s32.totalorder 2, %s12
      // Predicated region
      $region41: #{tpu_custom_call.1} parent=5 // pred_check
        %p329 = pneg %p328
      $region42: #{tpu_custom_call.1} parent=5 // pred_check_branch
        %331 = sbr.rel (%p329) target = $region44
      $region43: #{tpu_custom_call.1} parent=5 // pred_region
        %s332 = ssub.s32 %s12, 2
        // Predicated region
        $region45: #{tpu_custom_call.1} parent=43 // pred_check
          %p333 = pneg %p119
        $region46: #{tpu_custom_call.1} parent=43 // pred_check_branch
          %335 = sbr.rel (%p333) target = $region48
        $region47: #{tpu_custom_call.1} parent=43 // pred_region
          %p336 = scmp.lt.s32.totalorder %s18, 3
          %s337 = scalar_select %p336, %s18, 3
          %s338 = smul.addr %s337, 8
          %s339 = scalar_lea.vmem %s3, %s338
        $region48: #{tpu_custom_call.1} parent=43 // pred_fallthru
          _
      $region44: #{tpu_custom_call.1} parent=5 // pred_fallthru
        _
    $region6: #{tpu_custom_call.1} parent=1 // loop_footer
      %s16 = sadd.s32 1, %s12
    $region7: #{tpu_custom_call.1} parent=1 // loop_footer_branch
      %11 = sbr.rel target = $region3
    $region8: #{tpu_custom_call.1} parent=1 // loop_exit
      _
    %340 = vsyncpa [#allocation3], 1
    %s341 = scalar_lea.sflag [#allocation3], 1
    %342 = vsyncpa %s341, 1

</llo_original>
